<compile_context>
chip_gen: v7x
topology: tpu7x:2x2x1
jax: 0.10.0
libtpu: 0.0.40
codegen_flags: <defaults>
</compile_context>

<pallas_src>
import functools

import jax
import jax.numpy as jnp
from jax.experimental import pallas as pl
from jax.experimental.pallas import tpu as pltpu


def _round_up(n, m):
    return (n + m - 1) // m * m


def qnet_kernel(x_ref, w1_ref, b1_ref, w2_ref, b2_ref, o_ref):
    # MXU matmul with f32 accumulation; bias add + ReLU on the f32 accumulator.
    h = jnp.dot(x_ref[...], w1_ref[...], preferred_element_type=jnp.float32)
    h = jnp.maximum(h + b1_ref[...], 0.0)
    o = jnp.dot(h.astype(w2_ref.dtype), w2_ref[...],
                preferred_element_type=jnp.float32)
    o_ref[...] = (o + b2_ref[...]).astype(o_ref.dtype)


def pack_params(w1, b1, w2, b2, dtype=jnp.float32):
    """One-time packing of parameters into TPU-friendly slabs.

    w1: (in, hid), b1: (hid,), w2: (hid, out), b2: (out,)
    Returns:
      w1p: (in, hid_pad)        weights in `dtype` (f32 or bf16)
      b1p: (1, hid_pad) f32     biases always kept in f32
      w2p: (hid_pad, out_pad)   weights in `dtype`
      b2p: (1, out_pad) f32
    where hid_pad/out_pad = round_up(., 128).  The input dim is NOT padded.
    """
    in_dim, hid_dim = w1.shape
    out_dim = w2.shape[1]
    hid_pad = _round_up(hid_dim, 128)
    out_pad = _round_up(out_dim, 128)

    w1p = jnp.zeros((in_dim, hid_pad), dtype).at[:, :hid_dim].set(w1.astype(dtype))
    b1p = jnp.zeros((1, hid_pad), jnp.float32).at[0, :hid_dim].set(
        b1.reshape(-1).astype(jnp.float32))
    w2p = jnp.zeros((hid_pad, out_pad), dtype).at[:hid_dim, :out_dim].set(
        w2.astype(dtype))
    b2p = jnp.zeros((1, out_pad), jnp.float32).at[0, :out_dim].set(
        b2.reshape(-1).astype(jnp.float32))
    return w1p, b1p, w2p, b2p


@functools.partial(jax.jit, static_argnums=(5, 6))
def linear_qnet_forward(x, w1p, b1p, w2p, b2p, out_dim, tb=1024):
    """x: (B, in_dim) -> (B, out_dim) float32, using packed params.

    NOTE: B is a compile-time shape; in an RL training loop, bucket/pad the
    replay batch to a small fixed set of sizes to avoid per-shape recompiles.
    """
    B, in_dim = x.shape
    assert w1p.shape[0] == in_dim
    hid_pad = w1p.shape[1]
    out_pad = w2p.shape[1]
    dtype = w1p.dtype

    # --- Batch tiling: pad only to a multiple of 8 sublanes; when multiple
    # grid steps are needed, use an even step count so the 'parallel' axis
    # splits evenly across v7x's two TensorCores. ---
    b8 = _round_up(B, 8)
    if b8 <= tb:
        n_steps = 1
        tb_eff = b8
    else:
        n_steps = _round_up(pl.cdiv(b8, tb), 2)
        tb_eff = _round_up(pl.cdiv(B, n_steps), 8)
    b_pad = tb_eff * n_steps

    # Pad/cast x only as needed (no lane padding: last dim stays in_dim).
    if b_pad != B or x.dtype != dtype:
        x_in = jnp.zeros((b_pad, in_dim), dtype).at[:B, :].set(x.astype(dtype))
    else:
        x_in = x

    out = pl.pallas_call(
        qnet_kernel,
        out_shape=jax.ShapeDtypeStruct((b_pad, out_pad), jnp.float32),
        grid=(n_steps,),
        in_specs=[
            pl.BlockSpec((tb_eff, in_dim), lambda i: (i, 0)),      # x tile
            pl.BlockSpec((in_dim, hid_pad), lambda i: (0, 0)),     # resident W1
            pl.BlockSpec((1, hid_pad), lambda i: (0, 0)),          # resident b1 (f32)
            pl.BlockSpec((hid_pad, out_pad), lambda i: (0, 0)),    # resident W2
            pl.BlockSpec((1, out_pad), lambda i: (0, 0)),          # resident b2 (f32)
        ],
        out_specs=pl.BlockSpec((tb_eff, out_pad), lambda i: (i, 0)),
        compiler_params=pltpu.CompilerParams(
            dimension_semantics=("parallel",),  # shards batch steps on v7x's 2 TCs
        ),
    )(x_in, w1p, b1p, w2p, b2p)
    return out[:B, :out_dim]


def init_params(key, input_dim, hidden_dim, output_dim):
    """Deterministic init mimicking nn.Linear default: U(-1/sqrt(fan_in), +)."""
    k1, k2, k3, k4 = jax.random.split(key, 4)
    lim1 = 1.0 / jnp.sqrt(input_dim)
    lim2 = 1.0 / jnp.sqrt(hidden_dim)
    # stored as (in, out): transpose of PyTorch's (out, in) weight
    w1 = jax.random.uniform(k1, (input_dim, hidden_dim), jnp.float32, -lim1, lim1)
    b1 = jax.random.uniform(k2, (hidden_dim,), jnp.float32, -lim1, lim1)
    w2 = jax.random.uniform(k3, (hidden_dim, output_dim), jnp.float32, -lim2, lim2)
    b2 = jax.random.uniform(k4, (output_dim,), jnp.float32, -lim2, lim2)
    return w1, b1, w2, b2


if __name__ == "__main__":
    # Typical snake-game Q-net sizes, kept small.
    batch, input_dim, hidden_dim, output_dim = 4, 11, 32, 3

    key = jax.random.PRNGKey(0)
    kx, kp = jax.random.split(key)
    x = jax.random.normal(kx, (batch, input_dim), jnp.float32)
    w1, b1, w2, b2 = init_params(kp, input_dim, hidden_dim, output_dim)
    ref_fn = lambda xx: jnp.maximum(xx @ w1 + b1, 0.0) @ w2 + b2

    # --- f32 path (exact-semantics check, tiny inference batch, grid=1) ---
    w1p, b1p, w2p, b2p = pack_params(w1, b1, w2, b2, dtype=jnp.float32)
    out = jax.block_until_ready(
        linear_qnet_forward(x, w1p, b1p, w2p, b2p, output_dim))
    assert out.shape == (batch, output_dim)
    assert jnp.allclose(out, ref_fn(x), atol=1e-5, rtol=1e-5)

    # --- training-sized batch with a forced multi-step grid: B=600, tb=256 ->
    #     4 even grid steps of 152 rows (b_pad=608, only 8 rows of padding),
    #     weights/biases resident, 'parallel' semantics for v7x ---
    xb = jax.random.normal(jax.random.PRNGKey(1), (600, input_dim), jnp.float32)
    outb = jax.block_until_ready(
        linear_qnet_forward(xb, w1p, b1p, w2p, b2p, output_dim, 256))
    assert outb.shape == (600, output_dim)
    assert jnp.allclose(outb, ref_fn(xb), atol=1e-4, rtol=1e-4)

    # --- default large tile (tb=1024): B=600 runs as a single grid step ---
    outb1 = jax.block_until_ready(
        linear_qnet_forward(xb, w1p, b1p, w2p, b2p, output_dim))
    assert jnp.allclose(outb1, ref_fn(xb), atol=1e-4, rtol=1e-4)

    # --- bf16 weights/activations (v6e/v7x MXU-native), f32 biases + f32
    #     accumulation, f32 output ---
    w1p_bf, b1p_bf, w2p_bf, b2p_bf = pack_params(w1, b1, w2, b2, dtype=jnp.bfloat16)
    out_bf = jax.block_until_ready(
        linear_qnet_forward(x, w1p_bf, b1p_bf, w2p_bf, b2p_bf, output_dim))
    assert jnp.allclose(out_bf, ref_fn(x), atol=2e-2, rtol=2e-2)

    # TODO(synk): save()/load() checkpointing and the optimizer are host-side
    # concerns with no Pallas equivalent; only the forward pass is kernelized.
    print("KERNEL_OK")
</pallas_src>

<mosaic_0001>
module attributes {stable_mosaic.version = 11 : i64} {
  func.func @qnet_kernel(%arg0: i32, %arg1: memref<8x11xf32, #tpu.memory_space<vmem>>, %arg2: memref<11x128xf32, #tpu.memory_space<vmem>>, %arg3: memref<1x128xf32, #tpu.memory_space<vmem>>, %arg4: memref<128x128xf32, #tpu.memory_space<vmem>>, %arg5: memref<1x128xf32, #tpu.memory_space<vmem>>, %arg6: memref<8x128xf32, #tpu.memory_space<vmem>>) attributes {dimension_semantics = [#tpu.dimension_semantics<parallel>], iteration_bounds = array<i64: 1>, scalar_prefetch = 0 : i64, scratch_operands = 0 : i64, tpu.core_type = #tpu.core_type<tc>, window_params = [{transform_indices = @transform_0, window_bounds = array<i64: 8, 11>}, {pipeline_mode = #tpu.pipeline_mode<synchronous>, transform_indices = @transform_1, window_bounds = array<i64: 11, 128>}, {pipeline_mode = #tpu.pipeline_mode<synchronous>, transform_indices = @transform_2, window_bounds = array<i64: 1, 128>}, {pipeline_mode = #tpu.pipeline_mode<synchronous>, transform_indices = @transform_3, window_bounds = array<i64: 128, 128>}, {pipeline_mode = #tpu.pipeline_mode<synchronous>, transform_indices = @transform_4, window_bounds = array<i64: 1, 128>}, {transform_indices = @transform_5, window_bounds = array<i64: 8, 128>}]} {
    %c0 = arith.constant 0 : index
    %c0_0 = arith.constant 0 : index
    %0 = vector.load %arg1[%c0, %c0_0] : memref<8x11xf32, #tpu.memory_space<vmem>>, vector<8x11xf32>
    %c0_1 = arith.constant 0 : index
    %c0_2 = arith.constant 0 : index
    %1 = vector.load %arg2[%c0_1, %c0_2] : memref<11x128xf32, #tpu.memory_space<vmem>>, vector<11x128xf32>
    %cst = arith.constant dense<0.000000e+00> : vector<8x128xf32>
    %2 = tpu.matmul %0, %1, %cst {dimension_numbers = #tpu.dot_dimension_numbers<[1], [0], [0], [1], [0, 0, 1, 1], [], []>} : vector<8x11xf32>, vector<11x128xf32>, vector<8x128xf32> -> vector<8x128xf32>
    %c0_3 = arith.constant 0 : index
    %c0_4 = arith.constant 0 : index
    %3 = vector.load %arg3[%c0_3, %c0_4] : memref<1x128xf32, #tpu.memory_space<vmem>>, vector<1x128xf32>
    %4 = vector.broadcast %3 : vector<1x128xf32> to vector<8x128xf32>
    %5 = arith.addf %2, %4 : vector<8x128xf32>
    %cst_5 = arith.constant 0.000000e+00 : f32
    %6 = vector.broadcast %cst_5 : f32 to vector<8x128xf32>
    %7 = arith.maximumf %5, %6 : vector<8x128xf32>
    %c0_6 = arith.constant 0 : index
    %c0_7 = arith.constant 0 : index
    %8 = vector.load %arg4[%c0_6, %c0_7] : memref<128x128xf32, #tpu.memory_space<vmem>>, vector<128x128xf32>
    %cst_8 = arith.constant dense<0.000000e+00> : vector<8x128xf32>
    %9 = tpu.matmul %7, %8, %cst_8 {dimension_numbers = #tpu.dot_dimension_numbers<[1], [0], [0], [1], [0, 0, 1, 1], [], []>} : vector<8x128xf32>, vector<128x128xf32>, vector<8x128xf32> -> vector<8x128xf32>
    %c0_9 = arith.constant 0 : index
    %c0_10 = arith.constant 0 : index
    %10 = vector.load %arg5[%c0_9, %c0_10] : memref<1x128xf32, #tpu.memory_space<vmem>>, vector<1x128xf32>
    %11 = vector.broadcast %10 : vector<1x128xf32> to vector<8x128xf32>
    %12 = arith.addf %9, %11 : vector<8x128xf32>
    %c0_11 = arith.constant 0 : index
    %c0_12 = arith.constant 0 : index
    %13 = vector.load %arg6[%c0_11, %c0_12] : memref<8x128xf32, #tpu.memory_space<vmem>>, vector<8x128xf32>
    tpu.vector_store %arg6[%c0_11, %c0_12], %12 {strides = array<i32>} : memref<8x128xf32, #tpu.memory_space<vmem>>, vector<8x128xf32>,
    return
  }
  func.func @transform_0(%arg0: i32) -> (i32, i32) {
    %c0_i32 = arith.constant 0 : i32
    %c0_i32_0 = arith.constant 0 : i32
    return %arg0, %c0_i32 : i32, i32
  }
  func.func @transform_1(%arg0: i32) -> (i32, i32) {
    %c0_i32 = arith.constant 0 : i32
    %c0_i32_0 = arith.constant 0 : i32
    %c0_i32_1 = arith.constant 0 : i32
    return %c0_i32, %c0_i32_0 : i32, i32
  }
  func.func @transform_2(%arg0: i32) -> (i32, i32) {
    %c0_i32 = arith.constant 0 : i32
    %c0_i32_0 = arith.constant 0 : i32
    %c0_i32_1 = arith.constant 0 : i32
    return %c0_i32, %c0_i32_0 : i32, i32
  }
  func.func @transform_3(%arg0: i32) -> (i32, i32) {
    %c0_i32 = arith.constant 0 : i32
    %c0_i32_0 = arith.constant 0 : i32
    %c0_i32_1 = arith.constant 0 : i32
    return %c0_i32, %c0_i32_0 : i32, i32
  }
  func.func @transform_4(%arg0: i32) -> (i32, i32) {
    %c0_i32 = arith.constant 0 : i32
    %c0_i32_0 = arith.constant 0 : i32
    %c0_i32_1 = arith.constant 0 : i32
    return %c0_i32, %c0_i32_0 : i32, i32
  }
  func.func @transform_5(%arg0: i32) -> (i32, i32) {
    %c0_i32 = arith.constant 0 : i32
    %c0_i32_0 = arith.constant 0 : i32
    return %arg0, %c0_i32 : i32, i32
  }
}

</mosaic_0001>

<llo_original>
// kernel: linear_qnet_forward.1
$region0: #{linear_qnet_forward.1}
  #allocation0 [shape = 'u32[]', space=smem, size = 0x4, offset = 0x4, fixed_abs, tag = 'smem constant byte address 0x4 - core index']
  #allocation1 [shape = 'u32[144,128]{1,0:T(1,128)}', space=vmem, size = 0x12000, scoped, tag = 'internal scratch']
  %s0 = inlined_call_operand.vmem [shape: f32[8,11], index: 0, kind: input, shape index: {}]
  %s1 = inlined_call_operand.vmem [shape: f32[11,128], index: 1, kind: input, shape index: {}]
  %s2 = inlined_call_operand.vmem [shape: f32[1,128], index: 2, kind: input, shape index: {}]
  %s3 = inlined_call_operand.hbm [shape: f32[128,128], index: 3, kind: input, shape index: {}]
  %s4 = inlined_call_operand.vmem [shape: f32[1,128], index: 4, kind: input, shape index: {}]
  %s5 = inlined_call_operand.vmem [shape: f32[8,128], index: 5, kind: output, shape index: {}]
  %s6 = sld [smem:[#allocation0]]
  $region34: #{linear_qnet_forward.1} parent=0
    _
  %s8 = ssub.s32 1, %s6
  %s9 = scalar_select 0, %s8, %s6
  $region1: #{linear_qnet_forward.1} parent=0
    #allocation2 [shape = 'u8[65536]{0}', space=vmem, size = 0x10000, scoped, tag = 'input window, operand 3, single buffered']
    #allocation3 [shape = 's32[1]{0}', space=sflag, size = 0x4, scoped, tag = 'scoped memory for linear_qnet_forward.1']
    %10 = vsyncpa [#allocation3], 0
    // Predicated region
    $region2: #{linear_qnet_forward.1} parent=1 // pred_check
      _
    $region3: #{linear_qnet_forward.1} parent=1 // pred_check_branch
      %12 = sbr.rel (0) target = $region5
    $region4: #{linear_qnet_forward.1} parent=1 // pred_region
      _
    $region5: #{linear_qnet_forward.1} parent=1 // pred_fallthru
      _
    // Predicated region
    $region6: #{linear_qnet_forward.1} parent=1 // pred_check
      _
    $region7: #{linear_qnet_forward.1} parent=1 // pred_check_branch
      %14 = sbr.rel (0) target = $region9
    $region8: #{linear_qnet_forward.1} parent=1 // pred_region
      _
    $region9: #{linear_qnet_forward.1} parent=1 // pred_fallthru
      _
    // Predicated region
    $region10: #{linear_qnet_forward.1} parent=1 // pred_check
      _
    $region11: #{linear_qnet_forward.1} parent=1 // pred_check_branch
      %16 = sbr.rel (0) target = $region13
    $region12: #{linear_qnet_forward.1} parent=1 // pred_region
      _
    $region13: #{linear_qnet_forward.1} parent=1 // pred_fallthru
      _
    // Predicated region
    $region14: #{linear_qnet_forward.1} parent=1 // pred_check
      _
    $region15: #{linear_qnet_forward.1} parent=1 // pred_check_branch
      %18 = sbr.rel (0) target = $region17
    $region16: #{linear_qnet_forward.1} parent=1 // pred_region
      %s20 = ssub.s32 2048, 2048
      %21 = vsyncadd [#allocation3], %s20
      %s22 = sshll.u32 [#allocation2], 4
      %s23 = int_to_ptr.vmem [resolvable:$true] %s22
      %28 = dma.hbm_to_vmem [thread:$0]  %s3, 2048, %s23, [#allocation3], 128, 128, 8
    $region17: #{linear_qnet_forward.1} parent=1 // pred_fallthru
      _
    // Predicated region
    $region18: #{linear_qnet_forward.1} parent=1 // pred_check
      _
    $region19: #{linear_qnet_forward.1} parent=1 // pred_check_branch
      %30 = sbr.rel (0) target = $region21
    $region20: #{linear_qnet_forward.1} parent=1 // pred_region
      _
    $region21: #{linear_qnet_forward.1} parent=1 // pred_fallthru
      _
    // Predicated region
    $region22: #{linear_qnet_forward.1} parent=1 // pred_check
      _
    $region23: #{linear_qnet_forward.1} parent=1 // pred_check_branch
      %32 = sbr.rel (0) target = $region25
    $region24: #{linear_qnet_forward.1} parent=1 // pred_region
      %33 = dma.done [#allocation3], 2048
    $region25: #{linear_qnet_forward.1} parent=1 // pred_fallthru
      _
    %v34 = vld [vmem:[%s0] sm:$0xff]
    %v35 = vld [vmem:[%s1] sm:$0xff]
    %v36 = vld [vmem:[%s1 + $0x8] sm:$0x7]
    %v37 = vld [vmem:[%s2] sm:$0x1]
    %v39 = vlaneseq
    %v40 = vshrl.u32 %v39, 7
    %v41 = vsub.s32 0, %v40
    %v42 = vrot.slane %v37, %v41
    %vm44 = vcmask 89088
    %v46 = vsel %vm44, %v34, 0
    %vm48 = vcmask 1042432
    %v50 = vsel %vm48, %v36, 0
    %52 = vmatprep.subr.mxu0 0.0
    %53 = vmatpush1.msra.mxu0 %v35
    %54 = vmatprep.subr.mxu0 0.0
    %55 = vmatpush1.msra.mxu0 %v50
    %56 = vmatprep.subr.mxu0 0.0
    %57 = vmatpush1.msra.mxu0 0.0
    %58 = vmatprep.subr.mxu0 0.0
    %59 = vmatpush1.msra.mxu0 0.0
    %60 = vmatprep.subr.mxu0 0.0
    %61 = vmatpush1.msra.mxu0 0.0
    %62 = vmatprep.subr.mxu0 0.0
    %63 = vmatpush1.msra.mxu0 0.0
    %64 = vmatprep.subr.mxu0 0.0
    %65 = vmatpush1.msra.mxu0 0.0
    %66 = vmatprep.subr.mxu0 0.0
    %67 = vmatpush1.msra.mxu0 0.0
    %68 = vmatprep.subr.mxu0 0.0
    %69 = vmatpush1.msra.mxu0 0.0
    %70 = vmatprep.subr.mxu0 0.0
    %71 = vmatpush1.msra.mxu0 0.0
    %72 = vmatprep.subr.mxu0 0.0
    %73 = vmatpush1.msra.mxu0 0.0
    %74 = vmatprep.subr.mxu0 0.0
    %75 = vmatpush1.msra.mxu0 0.0
    %76 = vmatprep.subr.mxu0 0.0
    %77 = vmatpush1.msra.mxu0 0.0
    %78 = vmatprep.subr.mxu0 0.0
    %79 = vmatpush1.msra.mxu0 0.0
    %80 = vmatprep.subr.mxu0 0.0
    %81 = vmatpush1.msra.mxu0 0.0
    %82 = vmatprep.subr.mxu0 0.0
    %83 = vmatpush1.msra.mxu0 0.0
    %84 = vmatprep.subr.mxu0 0.0
    %85 = vmatpush1.msra.mxu0 0.0
    %86 = vmatprep.subr.mxu0 0.0
    %87 = vmatpush1.msra.mxu0 0.0
    %88 = vmatprep.subr.mxu0 0.0
    %89 = vmatpush1.msra.mxu0 0.0
    %90 = vmatprep.subr.mxu0 0.0
    %91 = vmatpush1.msra.mxu0 0.0
    %92 = vmatprep.subr.mxu0 0.0
    %93 = vmatpush1.msra.mxu0 0.0
    %94 = vmatprep.subr.mxu0 0.0
    %95 = vmatpush1.msra.mxu0 0.0
    %96 = vmatprep.subr.mxu0 0.0
    %97 = vmatpush1.msra.mxu0 0.0
    %98 = vmatprep.subr.mxu0 0.0
    %99 = vmatpush1.msra.mxu0 0.0
    %100 = vmatprep.subr.mxu0 0.0
    %101 = vmatpush1.msra.mxu0 0.0
    %102 = vmatprep.subr.mxu0 0.0
    %103 = vmatpush1.msra.mxu0 0.0
    %104 = vmatprep.subr.mxu0 0.0
    %105 = vmatpush1.msra.mxu0 0.0
    %106 = vmatprep.subr.mxu0 0.0
    %107 = vmatpush1.msra.mxu0 0.0
    %108 = vmatprep.subr.mxu0 0.0
    %109 = vmatpush1.msra.mxu0 0.0
    %110 = vmatprep.subr.mxu0 0.0
    %111 = vmatpush1.msra.mxu0 0.0
    %112 = vmatprep.subr.mxu0 0.0
    %113 = vmatpush1.msra.mxu0 0.0
    %114 = vmatprep.subr.mxu0 0.0
    %115 = vmatpush1.msra.mxu0 0.0
    %116 = vmatprep.mubr.f32.mxu0 0.0
    %117 = vmatmul.mubr.f32.gmra.mrb[0].mxu0 %v46
    %v118 = vpop.f32.mrb[0].mxu0
    %v119 = vadd.f32 %v42, %v118
    %v120 = vpop.f32.mrb[0].mxu0
    %121 = vdwg.mxu0
    %v122 = vmax.f32 %v119, 0.0
    %v123 = vld [vmem:[#allocation2] sm:$0xff]
    %v124 = vld [vmem:[#allocation2 + $0x8] sm:$0xff]
    %v125 = vld [vmem:[#allocation2 + $0x10] sm:$0xff]
    %v126 = vld [vmem:[#allocation2 + $0x18] sm:$0xff]
    %v127 = vld [vmem:[#allocation2 + $0x20] sm:$0xff]
    %v128 = vld [vmem:[#allocation2 + $0x28] sm:$0xff]
    %v129 = vld [vmem:[#allocation2 + $0x30] sm:$0xff]
    %v130 = vld [vmem:[#allocation2 + $0x38] sm:$0xff]
    %v131 = vld [vmem:[#allocation2 + $0x40] sm:$0xff]
    %v132 = vld [vmem:[#allocation2 + $0x48] sm:$0xff]
    %v133 = vld [vmem:[#allocation2 + $0x50] sm:$0xff]
    %v134 = vld [vmem:[#allocation2 + $0x58] sm:$0xff]
    %v135 = vld [vmem:[#allocation2 + $0x60] sm:$0xff]
    %v136 = vld [vmem:[#allocation2 + $0x68] sm:$0xff]
    %v137 = vld [vmem:[#allocation2 + $0x70] sm:$0xff]
    %v138 = vld [vmem:[#allocation2 + $0x78] sm:$0xff]
    %v139 = vld [vmem:[%s4] sm:$0x1]
    %v141 = vlaneseq
    %v142 = vshrl.u32 %v141, 7
    %v143 = vsub.s32 0, %v142
    %v144 = vrot.slane %v139, %v143
    %146 = vmatprep.subr.mxu0 0.0
    %147 = vmatpush1.msra.mxu0 %v123
    %148 = vmatprep.subr.mxu0 0.0
    %149 = vmatpush1.msra.mxu0 %v124
    %150 = vmatprep.subr.mxu0 0.0
    %151 = vmatpush1.msra.mxu0 %v125
    %152 = vmatprep.subr.mxu0 0.0
    %153 = vmatpush1.msra.mxu0 %v126
    %154 = vmatprep.subr.mxu0 0.0
    %155 = vmatpush1.msra.mxu0 %v127
    %156 = vmatprep.subr.mxu0 0.0
    %157 = vmatpush1.msra.mxu0 %v128
    %158 = vmatprep.subr.mxu0 0.0
    %159 = vmatpush1.msra.mxu0 %v129
    %160 = vmatprep.subr.mxu0 0.0
    %161 = vmatpush1.msra.mxu0 %v130
    %162 = vmatprep.subr.mxu0 0.0
    %163 = vmatpush1.msra.mxu0 %v131
    %164 = vmatprep.subr.mxu0 0.0
    %165 = vmatpush1.msra.mxu0 %v132
    %166 = vmatprep.subr.mxu0 0.0
    %167 = vmatpush1.msra.mxu0 %v133
    %168 = vmatprep.subr.mxu0 0.0
    %169 = vmatpush1.msra.mxu0 %v134
    %170 = vmatprep.subr.mxu0 0.0
    %171 = vmatpush1.msra.mxu0 %v135
    %172 = vmatprep.subr.mxu0 0.0
    %173 = vmatpush1.msra.mxu0 %v136
    %174 = vmatprep.subr.mxu0 0.0
    %175 = vmatpush1.msra.mxu0 %v137
    %176 = vmatprep.subr.mxu0 0.0
    %177 = vmatpush1.msra.mxu0 %v138
    %178 = vmatprep.subr.mxu0 0.0
    %179 = vmatpush1.msra.mxu0 0.0
    %180 = vmatprep.subr.mxu0 0.0
    %181 = vmatpush1.msra.mxu0 0.0
    %182 = vmatprep.subr.mxu0 0.0
    %183 = vmatpush1.msra.mxu0 0.0
    %184 = vmatprep.subr.mxu0 0.0
    %185 = vmatpush1.msra.mxu0 0.0
    %186 = vmatprep.subr.mxu0 0.0
    %187 = vmatpush1.msra.mxu0 0.0
    %188 = vmatprep.subr.mxu0 0.0
    %189 = vmatpush1.msra.mxu0 0.0
    %190 = vmatprep.subr.mxu0 0.0
    %191 = vmatpush1.msra.mxu0 0.0
    %192 = vmatprep.subr.mxu0 0.0
    %193 = vmatpush1.msra.mxu0 0.0
    %194 = vmatprep.subr.mxu0 0.0
    %195 = vmatpush1.msra.mxu0 0.0
    %196 = vmatprep.subr.mxu0 0.0
    %197 = vmatpush1.msra.mxu0 0.0
    %198 = vmatprep.subr.mxu0 0.0
    %199 = vmatpush1.msra.mxu0 0.0
    %200 = vmatprep.subr.mxu0 0.0
    %201 = vmatpush1.msra.mxu0 0.0
    %202 = vmatprep.subr.mxu0 0.0
    %203 = vmatpush1.msra.mxu0 0.0
    %204 = vmatprep.subr.mxu0 0.0
    %205 = vmatpush1.msra.mxu0 0.0
    %206 = vmatprep.subr.mxu0 0.0
    %207 = vmatpush1.msra.mxu0 0.0
    %208 = vmatprep.subr.mxu0 0.0
    %209 = vmatpush1.msra.mxu0 0.0
    %210 = vmatprep.mubr.f32.mxu0 0.0
    %211 = vmatmul.mubr.f32.gmra.mrb[0].mxu0 %v122
    %v212 = vpop.f32.mrb[0].mxu0
    %v213 = vadd.f32 %v144, %v212
    %v214 = vpop.f32.mrb[0].mxu0
    %215 = vdwg.mxu0
    %216 = vst [vmem:[%s5] sm:$0xff] %v213
    // Predicated region
    $region26: #{linear_qnet_forward.1} parent=1 // pred_check
      _
    $region27: #{linear_qnet_forward.1} parent=1 // pred_check_branch
      %218 = sbr.rel (0) target = $region29
    $region28: #{linear_qnet_forward.1} parent=1 // pred_region
      _
    $region29: #{linear_qnet_forward.1} parent=1 // pred_fallthru
      _
    // Predicated region
    $region30: #{linear_qnet_forward.1} parent=1 // pred_check
      _
    $region31: #{linear_qnet_forward.1} parent=1 // pred_check_branch
      %220 = sbr.rel (0) target = $region33
    $region32: #{linear_qnet_forward.1} parent=1 // pred_region
      _
    $region33: #{linear_qnet_forward.1} parent=1 // pred_fallthru
      _
    %221 = vsyncpa [#allocation3], 1

</llo_original>
